<compile_context>
chip_gen: v7x
topology: tpu7x:2x2x1
jax: 0.10.0
libtpu: 0.0.40
codegen_flags: <defaults>
</compile_context>

<pallas_src>
import functools

import jax
import jax.numpy as jnp
from jax.experimental import pallas as pl
from jax.experimental.pallas import tpu as pltpu

LANE = 128
MAX_TILE_BYTES = 4 * 1024 * 1024  # 4 MiB per pipelined input buffer


def _cdiv(a: int, b: int) -> int:
    return -(-a // b)


def _tensorcores_per_chip() -> int:
    """Heuristic: 1 TC for v5e/v6e, 2 TCs for megacore chips and v7x."""
    try:
        kind = jax.devices()[0].device_kind.lower()
    except Exception:
        return 1
    single_tc = ("v5e", "v5 lite", "v5lite", "v6e", "v6 lite", "v6lite")
    if any(m in kind for m in single_tc):
        return 1
    return 2


def _bce_sum_kernel(x_ref, o_ref, acc_ref, *, is_real, rows, tile_rows,
                    tiles_per_split, n_tiles, has_overflow, has_partial):
    c = pl.program_id(0)          # split (TensorCore) index
    k = pl.program_id(1)          # tile index within this split

    @pl.when(k == 0)
    def _init():
        acc_ref[...] = jnp.zeros_like(acc_ref)

    tile_idx = c * tiles_per_split + k   # logical tile index

    def _accum(v):
        # Lane/sublane-structured accumulation: pure VPU adds per step
        # (tile_rows is always a multiple of 8), no per-step cross-lane reduce.
        acc_ref[...] += jnp.sum(v.reshape(-1, 8, LANE), axis=0)

    def _compute():
        x = x_ref[...].astype(jnp.float32)
        # Numerically stable BCE-with-logits:
        #   target = 1: loss = softplus(-x) = max(-x,0) + log1p(exp(-|x|))
        #   target = 0: loss = softplus( x) = max( x,0) + log1p(exp(-|x|))
        tail = jnp.log1p(jnp.exp(-jnp.abs(x)))
        if is_real:
            loss = jnp.maximum(-x, 0.0) + tail
        else:
            loss = jnp.maximum(x, 0.0) + tail

        if not has_partial:
            # Tiling is exact over the (sentinel-padded) array: no mask ever.
            _accum(loss)
        else:
            is_full = (tile_idx + 1) * tile_rows <= rows

            @pl.when(is_full)
            def _full():
                _accum(loss)

            @pl.when(jnp.logical_not(is_full))
            def _partial():
                # Only the single boundary tile pays for the row mask.
                row = jax.lax.broadcasted_iota(jnp.int32, loss.shape, 0)
                valid = (tile_idx * tile_rows + row) < rows
                _accum(jnp.where(valid, loss, 0.0))

    if has_overflow:
        # Clamped overflow tile (odd n_tiles with 2 splits): skip all
        # EUP/VPU work; only its prefetch DMA is wasted.
        @pl.when(tile_idx < n_tiles)
        def _valid():
            _compute()
    else:
        _compute()

    @pl.when(k == tiles_per_split - 1)
    def _store():
        o_ref[...] = acc_ref[...]


def gan_loss(scores: jax.Array, is_real: bool, *,
             max_tile_bytes: int = MAX_TILE_BYTES,
             num_splits: int | None = None) -> jax.Array:
    """Equivalent of GAN.forward(scores, is_real): mean BCE-with-logits, shape []."""
    x = scores.reshape(-1)                    # native dtype; upcast inside kernel
    n = int(x.shape[0])
    if n == 0:
        # torch's mean over an empty tensor is NaN.
        return jnp.full((), jnp.nan, dtype=jnp.float32)

    itemsize = int(x.dtype.itemsize)
    # Packed sublane multiple: f32 -> 8, bf16/f16 -> 16, fp8/int8 -> 32.
    sublane = 8 * max(1, 4 // itemsize)

    # Pad only up to the next (sublane, 128)-aligned size using a sentinel
    # whose loss is exactly 0 in f32 (+1e9 for real, -1e9 for fake), so the
    # padded tail never needs masking.
    rows = _cdiv(_cdiv(n, LANE), sublane) * sublane
    padded_n = rows * LANE
    if padded_n != n:
        sentinel = 1e9 if is_real else -1e9
        x = jnp.pad(x, (0, padded_n - n), constant_values=sentinel)
    x2 = x.reshape(rows, LANE)

    # ~4 MiB per pipelined input buffer, rounded to the packed sublane multiple.
    max_tile_rows = max(sublane,
                        (max_tile_bytes // (LANE * itemsize)) // sublane * sublane)
    tile_rows = min(rows, max_tile_rows)
    n_tiles = _cdiv(rows, tile_rows)

    # Split the reduction range along a "parallel" grid axis only on chips
    # with >1 TensorCore and only when the wasted overflow DMA is amortized.
    if num_splits is None:
        num_splits = 2 if (_tensorcores_per_chip() >= 2 and n_tiles >= 4) else 1
    num_splits = max(1, min(int(num_splits), n_tiles))
    tiles_per_split = _cdiv(n_tiles, num_splits)

    has_overflow = (num_splits * tiles_per_split) > n_tiles   # at most 1 tile
    has_partial = (rows % tile_rows) != 0                     # at most 1 tile

    def x_index_map(c, k):
        # Clamp overflow tiles onto the last real block; their compute is
        # skipped inside the kernel via pl.when.
        return (jnp.minimum(c * tiles_per_split + k, n_tiles - 1), 0)

    kernel = functools.partial(
        _bce_sum_kernel,
        is_real=bool(is_real),
        rows=rows,
        tile_rows=tile_rows,
        tiles_per_split=tiles_per_split,
        n_tiles=n_tiles,
        has_overflow=has_overflow,
        has_partial=has_partial,
    )

    partials = pl.pallas_call(
        kernel,
        out_shape=jax.ShapeDtypeStruct((num_splits * 8, LANE), jnp.float32),
        grid_spec=pltpu.PrefetchScalarGridSpec(
            num_scalar_prefetch=0,
            grid=(num_splits, tiles_per_split),
            in_specs=[pl.BlockSpec((tile_rows, LANE), x_index_map)],
            out_specs=pl.BlockSpec((8, LANE), lambda c, k: (c, 0)),
            scratch_shapes=[pltpu.VMEM((8, LANE), jnp.float32)],
        ),
        compiler_params=pltpu.CompilerParams(
            dimension_semantics=("parallel", "arbitrary"),
            # 2 x 4 MiB double-buffered input + tiny accumulator; raise above
            # the v5e 16 MiB default scoped limit, still fine on v7x (64 MiB).
            vmem_limit_bytes=32 * 1024 * 1024,
        ),
        cost_estimate=pl.CostEstimate(
            flops=5 * n,
            transcendentals=2 * n,
            bytes_accessed=int(padded_n) * itemsize + num_splits * 8 * LANE * 4,
        ),
    )(x2)

    # TODO(synk): on v7x, bf16 transcendentals could close the remaining
    # EUP-bound gap; kept in f32 here for exact parity with the reference.

    # Single tiny cross-lane reduce + mean normalization in the wrapper.
    return (jnp.sum(partials) / n).astype(jnp.float32)


def _reference(scores: jax.Array, is_real: bool) -> jax.Array:
    x = scores.astype(jnp.float32)
    t = 1.0 if is_real else 0.0
    loss = jnp.maximum(x, 0.0) - x * t + jnp.log1p(jnp.exp(-jnp.abs(x)))
    return jnp.mean(loss)


if __name__ == "__main__":
    key = jax.random.PRNGKey(0)
    k0, k1, k2, k3 = jax.random.split(key, 4)

    # (scores, kwargs) — kwargs shrink tiles / force splits to exercise the
    # multi-tile, partial-last-block and overflow-tile code paths at small sizes.
    test_cases = [
        # small conv-score-like shape: exact tiling, single block, no mask
        (jax.random.normal(k0, (2, 4, 16, 16), dtype=jnp.float32) * 2.0, {}),
        # ragged size -> sentinel tail pad, single block, no mask
        (jax.random.normal(k1, (3, 7, 11), dtype=jnp.float32) * 2.0, {}),
        # multi-tile + forced 2-way split + partial last block + overflow tile
        (jax.random.normal(k2, (2, 260, 512), dtype=jnp.float32) * 2.0,
         {"max_tile_bytes": 64 * 1024, "num_splits": 2}),
        # bf16 input: packed-sublane (16-row) alignment path
        (jax.random.normal(k3, (3, 40, 50), dtype=jnp.bfloat16) * 2.0, {}),
    ]

    ok = True
    for scores, kwargs in test_cases:
        for is_real in (True, False):
            out = gan_loss(scores, is_real, **kwargs)
            jax.block_until_ready(out)
            ref = _reference(scores, is_real)
            if not jnp.allclose(out, ref, atol=1e-4, rtol=1e-4):
                ok = False
                print(f"MISMATCH shape={scores.shape} dtype={scores.dtype} "
                      f"is_real={is_real} kwargs={kwargs}: got {out}, want {ref}")

    if ok:
        print("KERNEL_OK")
</pallas_src>

<mosaic_0001>
module attributes {stable_mosaic.version = 11 : i64} {
  func.func @_bce_sum_kernel(%arg0: i32, %arg1: i32, %arg2: memref<16x128xf32, #tpu.memory_space<vmem>>, %arg3: memref<8x128xf32, #tpu.memory_space<vmem>>, %arg4: memref<8x128xf32, #tpu.memory_space<vmem>>) attributes {dimension_semantics = [#tpu.dimension_semantics<parallel>, #tpu.dimension_semantics<arbitrary>], iteration_bounds = array<i64: 1, 1>, scalar_prefetch = 0 : i64, scratch_operands = 1 : i64, tpu.core_type = #tpu.core_type<tc>, window_params = [{transform_indices = @transform_0, window_bounds = array<i64: 16, 128>}, {transform_indices = @transform_1, window_bounds = array<i64: 8, 128>}]} {
    %c0_i32 = arith.constant 0 : i32
    %0 = arith.cmpi eq, %arg1, %c0_i32 : i32
    %1 = arith.extui %0 : i1 to i32
    %c0_i32_0 = arith.constant 0 : i32
    %2 = arith.cmpi ne, %1, %c0_i32_0 : i32
    scf.if %2 {
      %cst_11 = arith.constant 0.000000e+00 : f32
      %22 = vector.broadcast %cst_11 : f32 to vector<8x128xf32>
      %c0_12 = arith.constant 0 : index
      %c0_13 = arith.constant 0 : index
      %23 = vector.load %arg4[%c0_12, %c0_13] : memref<8x128xf32, #tpu.memory_space<vmem>>, vector<8x128xf32>
      tpu.vector_store %arg4[%c0_12, %c0_13], %22 {strides = array<i32>} : memref<8x128xf32, #tpu.memory_space<vmem>>, vector<8x128xf32>,
    } else {
    }
    %c0 = arith.constant 0 : index
    %c0_1 = arith.constant 0 : index
    %3 = vector.load %arg2[%c0, %c0_1] : memref<16x128xf32, #tpu.memory_space<vmem>>, vector<16x128xf32>
    %4 = math.absf %3 : vector<16x128xf32>
    %cst = arith.constant 0.000000e+00 : f32
    %5 = vector.broadcast %cst : f32 to vector<16x128xf32>
    %6 = arith.subf %5, %4 : vector<16x128xf32>
    %7 = math.exp %6 : vector<16x128xf32>
    %8 = math.log1p %7 : vector<16x128xf32>
    %cst_2 = arith.constant 0.000000e+00 : f32
    %9 = vector.broadcast %cst_2 : f32 to vector<16x128xf32>
    %10 = arith.subf %9, %3 : vector<16x128xf32>
    %cst_3 = arith.constant 0.000000e+00 : f32
    %11 = vector.broadcast %cst_3 : f32 to vector<16x128xf32>
    %12 = arith.maximumf %10, %11 : vector<16x128xf32>
    %13 = arith.addf %12, %8 : vector<16x128xf32>
    %c0_4 = arith.constant 0 : index
    %c0_5 = arith.constant 0 : index
    %14 = vector.load %arg4[%c0_4, %c0_5] : memref<8x128xf32, #tpu.memory_space<vmem>>, vector<8x128xf32>
    %15 = vector.shape_cast %13 : vector<16x128xf32> to vector<2x8x128xf32>
    %cst_6 = arith.constant dense<0.000000e+00> : vector<8x128xf32>
    %16 = vector.multi_reduction <add>, %15, %cst_6 [0] : vector<2x8x128xf32> to vector<8x128xf32>
    %17 = arith.addf %14, %16 : vector<8x128xf32>
    %c0_7 = arith.constant 0 : index
    %c0_8 = arith.constant 0 : index
    %18 = vector.load %arg4[%c0_7, %c0_8] : memref<8x128xf32, #tpu.memory_space<vmem>>, vector<8x128xf32>
    tpu.vector_store %arg4[%c0_7, %c0_8], %17 {strides = array<i32>} : memref<8x128xf32, #tpu.memory_space<vmem>>, vector<8x128xf32>,
    %c0_i32_9 = arith.constant 0 : i32
    %19 = arith.cmpi eq, %arg1, %c0_i32_9 : i32
    %20 = arith.extui %19 : i1 to i32
    %c0_i32_10 = arith.constant 0 : i32
    %21 = arith.cmpi ne, %20, %c0_i32_10 : i32
    scf.if %21 {
      %c0_11 = arith.constant 0 : index
      %c0_12 = arith.constant 0 : index
      %22 = vector.load %arg4[%c0_11, %c0_12] : memref<8x128xf32, #tpu.memory_space<vmem>>, vector<8x128xf32>
      %c0_13 = arith.constant 0 : index
      %c0_14 = arith.constant 0 : index
      %23 = vector.load %arg3[%c0_13, %c0_14] : memref<8x128xf32, #tpu.memory_space<vmem>>, vector<8x128xf32>
      tpu.vector_store %arg3[%c0_13, %c0_14], %22 {strides = array<i32>} : memref<8x128xf32, #tpu.memory_space<vmem>>, vector<8x128xf32>,
    } else {
    }
    return
  }
  func.func @transform_0(%arg0: i32, %arg1: i32) -> (i32, i32) {
    %c1_i32 = arith.constant 1 : i32
    %0 = arith.muli %arg0, %c1_i32 : i32
    %1 = arith.addi %0, %arg1 : i32
    %c0_i32 = arith.constant 0 : i32
    %2 = arith.minsi %1, %c0_i32 : i32
    %c0_i32_0 = arith.constant 0 : i32
    %c0_i32_1 = arith.constant 0 : i32
    return %2, %c0_i32_0 : i32, i32
  }
  func.func @transform_1(%arg0: i32, %arg1: i32) -> (i32, i32) {
    %c0_i32 = arith.constant 0 : i32
    %c0_i32_0 = arith.constant 0 : i32
    return %arg0, %c0_i32 : i32, i32
  }
}

</mosaic_0001>

<llo_original>
// kernel: tpu_custom_call.1
$region0: #{tpu_custom_call.1}
  #allocation0 [shape = 'u32[]', space=smem, size = 0x4, offset = 0x4, fixed_abs, tag = 'smem constant byte address 0x4 - core index']
  #allocation1 [shape = 'u32[144,128]{1,0:T(1,128)}', space=vmem, size = 0x12000, scoped, tag = 'internal scratch']
  #allocation2 [shape = 'f32[8,128]{1,0:T(8,128)}', space=vmem, size = 0x1000, scoped, tag = 'scratch operand']
  %s0 = inlined_call_operand.hbm [shape: f32[16,128], index: 0, kind: input, shape index: {}]
  %s1 = inlined_call_operand.hbm [shape: f32[8,128], index: 1, kind: output, shape index: {}]
  %s2 = sld [smem:[#allocation0]]
  $region26: #{tpu_custom_call.1} parent=0
    _
  %s4 = ssub.s32 1, %s2
  %s5 = scalar_select 0, %s4, %s2
  $region1: #{tpu_custom_call.1} parent=0
    #allocation3 [shape = 'u8[8192]{0}', space=vmem, size = 0x2000, scoped, tag = 'input window, operand 0, single buffered']
    #allocation4 [shape = 's32[1]{0}', space=sflag, size = 0x4, scoped, tag = 'scoped memory for tpu_custom_call.1']
    #allocation5 [shape = 's32[1]{0}', space=sflag, size = 0x4, scoped, tag = 'scoped memory for tpu_custom_call.1']
    #allocation6 [shape = 'u8[4096]{0}', space=vmem, size = 0x1000, scoped, tag = 'output window, operand 0, single buffered']
    %6 = vsyncpa [#allocation4], 0
    %7 = vsyncpa [#allocation5], 0
    // Predicated region
    $region2: #{tpu_custom_call.1} parent=1 // pred_check
      _
    $region3: #{tpu_custom_call.1} parent=1 // pred_check_branch
      %9 = sbr.rel (0) target = $region5
    $region4: #{tpu_custom_call.1} parent=1 // pred_region
      %s10 = sadd.s32 0, 0
      %p11 = scmp.lt.s32.totalorder %s10, 0
      %s12 = scalar_select %p11, %s10, 0
      %s13 = smul.u32 2, %s12
      %s15 = ssub.s32 256, 256
      %16 = vsyncadd [#allocation4], %s15
      %s17 = smul.addr %s13, 128
      %s18 = scalar_lea.hbm %s0, %s17
      %s19 = sshll.u32 [#allocation3], 4
      %s20 = int_to_ptr.vmem [resolvable:$true] %s19
      %25 = dma.hbm_to_vmem [thread:$0]  %s18, 256, %s20, [#allocation4], 128, 128, 8
    $region5: #{tpu_custom_call.1} parent=1 // pred_fallthru
      _
    // Predicated region
    $region6: #{tpu_custom_call.1} parent=1 // pred_check
      _
    $region7: #{tpu_custom_call.1} parent=1 // pred_check_branch
      %27 = sbr.rel (0) target = $region9
    $region8: #{tpu_custom_call.1} parent=1 // pred_region
      %28 = dma.done [#allocation4], 256
    $region9: #{tpu_custom_call.1} parent=1 // pred_fallthru
      _
    %s29 = sadd.s32 0, 0
    %p30 = scmp.lt.s32.totalorder %s29, 0
    %s31 = scalar_select %p30, %s29, 0
    %s32 = smul.u32 2, %s31
    %p33 = scmp.eq.s32.totalorder 0, 0
    // Predicated region
    $region10: #{tpu_custom_call.1} parent=1 // pred_check
      %p34 = pneg %p33
    $region11: #{tpu_custom_call.1} parent=1 // pred_check_branch
      %36 = sbr.rel (%p34) target = $region13
    $region12: #{tpu_custom_call.1} parent=1 // pred_region
      %37 = vst [vmem:[#allocation2] sm:$0xff] 0.0
    $region13: #{tpu_custom_call.1} parent=1 // pred_fallthru
      _
    %v38 = vld [vmem:[#allocation3] sm:$0xff]
    %v39 = vld [vmem:[#allocation3 + $0x8] sm:$0xff]
    %v40 = vand.u32 2147483647, %v38
    %v41 = vand.u32 2147483647, %v39
    %v42 = vsub.f32 0.0, %v40
    %v43 = vsub.f32 0.0, %v41
    %v44 = vmul.f32 %v42, 1.442695
    %v45 = vpow.pop %v44
    %v46 = vmul.f32 %v43, 1.442695
    %v47 = vpow.pop %v46
    %v48 = vadd.f32 %v45, 1.0
    %v49 = vlog2.pop %v48
    %v50 = vmul.f32 %v49, 0.6931472
    %v51 = vmul.f32 -0.5, %v45
    %v52 = vadd.f32 %v51, 1.0
    %v53 = vmul.f32 %v52, %v45
    %v54 = vand.u32 2147483647, %v45
    %vm55 = vcmp.lt.f32.partialorder %v54, 0.0004427343
    %v56 = vsel %vm55, %v53, %v50
    %v57 = vadd.f32 %v47, 1.0
    %v58 = vlog2.pop %v57
    %v59 = vmul.f32 %v58, 0.6931472
    %v60 = vmul.f32 -0.5, %v47
    %v61 = vadd.f32 %v60, 1.0
    %v62 = vmul.f32 %v61, %v47
    %v63 = vand.u32 2147483647, %v47
    %vm64 = vcmp.lt.f32.partialorder %v63, 0.0004427343
    %v65 = vsel %vm64, %v62, %v59
    %v66 = vsub.f32 0.0, %v38
    %v67 = vsub.f32 0.0, %v39
    %v68 = vmax.f32 %v66, 0.0
    %v69 = vmax.f32 %v67, 0.0
    %v70 = vadd.f32 %v68, %v56
    %v71 = vadd.f32 %v69, %v65
    %v72 = vld [vmem:[#allocation2] sm:$0xff]
    %v73 = vadd.f32 %v70, %v71
    %v74 = vadd.f32 %v72, %v73
    %75 = vst [vmem:[#allocation2] sm:$0xff] %v74
    // Predicated region
    $region14: #{tpu_custom_call.1} parent=1 // pred_check
      %p76 = pneg %p33
    $region15: #{tpu_custom_call.1} parent=1 // pred_check_branch
      %78 = sbr.rel (%p76) target = $region17
    $region16: #{tpu_custom_call.1} parent=1 // pred_region
      %v79 = vld [vmem:[#allocation2] sm:$0xff]
      %80 = vst [vmem:[#allocation6] sm:$0xff] %v79
    $region17: #{tpu_custom_call.1} parent=1 // pred_fallthru
      _
    // Predicated region
    $region18: #{tpu_custom_call.1} parent=1 // pred_check
      _
    $region19: #{tpu_custom_call.1} parent=1 // pred_check_branch
      %82 = sbr.rel (0) target = $region21
    $region20: #{tpu_custom_call.1} parent=1 // pred_region
      %s84 = ssub.s32 128, 128
      %85 = vsyncadd [#allocation5], %s84
      %s87 = sshll.u32 [#allocation6], 4
      %s88 = int_to_ptr.vmem [resolvable:$true] %s87
      %90 = dma.vmem_to_hbm [thread:$0]  %s88, 128, %s1, [#allocation5]
    $region21: #{tpu_custom_call.1} parent=1 // pred_fallthru
      _
    // Predicated region
    $region22: #{tpu_custom_call.1} parent=1 // pred_check
      _
    $region23: #{tpu_custom_call.1} parent=1 // pred_check_branch
      %92 = sbr.rel (0) target = $region25
    $region24: #{tpu_custom_call.1} parent=1 // pred_region
      %93 = dma.done [#allocation5], 128
    $region25: #{tpu_custom_call.1} parent=1 // pred_fallthru
      _
    %94 = vsyncpa [#allocation4], 1
    %95 = vsyncpa [#allocation5], 1

</llo_original>
